<compile_context>
chip_gen: v6e
topology: v6e:2x2x1
jax: 0.10.0
libtpu: 0.0.40
codegen_flags: <defaults>
</compile_context>

<pallas_src>
import jax
import jax.numpy as jnp
from jax.experimental import pallas as pl
from jax.experimental.pallas import tpu as pltpu


def redistribution_kernel(xT_ref, up_ref, across_ref, down_ref, o_ref):
    """Applies all nX tridiagonal layers to one lane-dense batch tile.

    xT_ref:     (nY, TB)     activation tile, batch on lanes
    up_ref:     (nX, nY, 1)  sub-diagonal   W_k[i, i-1]  (row 0 zeroed)
    across_ref: (nX, nY, 1)  main diagonal  W_k[i, i]
    down_ref:   (nX, nY, 1)  super-diagonal W_k[i, i+1]  (row nY-1 zeroed)
    o_ref:      (nY, TB)     output tile
    """
    nX = up_ref.shape[0]
    nY = xT_ref.shape[0]
    acc0 = xT_ref[...].astype(jnp.float32)

    def layer(k, acc):
        # y^T[i, :] = across[i]*x^T[i, :] + up[i]*x^T[i-1, :] + down[i]*x^T[i+1, :]
        prev = pltpu.roll(acc, shift=1, axis=0)       # row i <- row i-1 (wrap at row 0 killed by up[0]=0)
        nxt = pltpu.roll(acc, shift=nY - 1, axis=0)   # row i <- row i+1 (wrap at last row killed by down[-1]=0)
        return across_ref[k] * acc + up_ref[k] * prev + down_ref[k] * nxt

    # Full unroll keeps LLO scheduling visibility for short chains; partial
    # unroll avoids codegen bloat for long ones.
    acc = jax.lax.fori_loop(0, nX, layer, acc0, unroll=(nX if nX <= 8 else 4))
    o_ref[...] = acc.astype(o_ref.dtype)


def _pick_batch_tile(B, requested=None, max_tile=2048):
    """Lane-dense batch tile: a multiple of 128 (full vreg lanes -> unmasked
    stores), large enough to amortize the ~0.35us per-grid-step cost, and small
    enough that the grid has >= 2 steps whenever the padded batch allows it
    (keeps both v7x TensorCores busy; harmless on 1-TC v5e/v6e)."""
    if requested is not None:
        if requested % 128 != 0:
            raise ValueError("batch_tile must be a multiple of 128 (lane-dense layout)")
        return requested
    b128 = ((B + 127) // 128) * 128
    if b128 <= 128:
        return 128
    half = ((b128 // 2 + 127) // 128) * 128
    return max(128, min(max_tile, half))


def pack_diagonals(outgoing_fracs_up, outgoing_fracs_across, outgoing_fracs_down):
    """(nY, nX) outgoing fractions -> three (nX, nY, 1) diagonal vectors.

    The boundary coefficients up[:, 0] and down[:, nY-1] (absent from the torch
    layer construction) are zeroed so the circular wraparound of the in-kernel
    sublane roll contributes nothing.
    """
    up = jnp.asarray(outgoing_fracs_up, jnp.float32).T        # (nX, nY)
    across = jnp.asarray(outgoing_fracs_across, jnp.float32).T
    down = jnp.asarray(outgoing_fracs_down, jnp.float32).T
    up = up.at[:, 0].set(0.0)
    down = down.at[:, -1].set(0.0)
    return up[..., None], across[..., None], down[..., None]   # (nX, nY, 1) each


def redistribution_forward(x, up_d, across_d, down_d, *, batch_tile=None):
    """x: (B, nY) float32; up_d/across_d/down_d: (nX, nY, 1) float32 diagonals."""
    B, nY = x.shape
    nX = up_d.shape[0]

    tb = _pick_batch_tile(B, batch_tile)
    n_steps = -(-B // tb)
    B_pad = n_steps * tb

    # Lane-dense activation: batch on the lane axis, zero-padded up to the tile.
    xT = jnp.pad(jnp.transpose(x), ((0, 0), (0, B_pad - B)))

    outT = pl.pallas_call(
        redistribution_kernel,
        out_shape=jax.ShapeDtypeStruct((nY, B_pad), x.dtype),
        grid_spec=pltpu.PrefetchScalarGridSpec(
            num_scalar_prefetch=0,
            grid=(n_steps,),
            in_specs=[
                pl.BlockSpec((nY, tb), lambda i: (0, i)),         # activation tile (lane-dense)
                pl.BlockSpec((nX, nY, 1), lambda i: (0, 0, 0)),   # sub-diagonals   (tiny, resident)
                pl.BlockSpec((nX, nY, 1), lambda i: (0, 0, 0)),   # main diagonals  (tiny, resident)
                pl.BlockSpec((nX, nY, 1), lambda i: (0, 0, 0)),   # super-diagonals (tiny, resident)
            ],
            out_specs=pl.BlockSpec((nY, tb), lambda i: (0, i)),   # lane-dense output
        ),
        compiler_params=pltpu.CompilerParams(
            # Batch tiles are independent -> shard across TensorCores on v7x.
            dimension_semantics=("parallel",),
        ),
    )(xT, up_d, across_d, down_d)

    return jnp.transpose(outT[:, :B])


def build_tridiagonal_weights(nX, nY, up, across, down):
    """Reproduce the torch __init__ dense weight construction (reference only).

    up, across, down: (nY, nX) arrays of outgoing fractions.
    Returns stacked weights of shape (nX, nY, nY) where
      W[x, y, y-1] = up[y, x], W[x, y, y] = across[y, x], W[x, y, y+1] = down[y, x].
    """
    W = jnp.zeros((nX, nY, nY), dtype=jnp.float32)
    y = jnp.arange(nY)
    for x in range(nX):
        W = W.at[x, y, y].set(across[:, x])
        W = W.at[x, y[1:], y[1:] - 1].set(up[1:, x])
        W = W.at[x, y[:-1], y[:-1] + 1].set(down[:-1, x])
    return W


if __name__ == "__main__":
    # Small, module-consistent shapes.  B=200 is deliberately awkward: the wrapper
    # zero-pads the lane axis to 256 and runs a 2-step "parallel" batch grid.
    nX, nY, B = 8, 16, 200

    key = jax.random.PRNGKey(0)
    k_up, k_across, k_down, k_x = jax.random.split(key, 4)

    # Deterministic "outgoing fraction" parameters (positive, < 1), shape (nY, nX).
    outgoing_fracs_up = jax.random.uniform(k_up, (nY, nX), jnp.float32) * 0.3
    outgoing_fracs_across = jax.random.uniform(k_across, (nY, nX), jnp.float32) * 0.3
    outgoing_fracs_down = jax.random.uniform(k_down, (nY, nX), jnp.float32) * 0.3
    efficiency = jnp.float32(0.9)  # module parameter; unused in forward()

    up_d, across_d, down_d = pack_diagonals(
        outgoing_fracs_up, outgoing_fracs_across, outgoing_fracs_down
    )

    # Input flux vector(s): (B, nY)
    x = jax.random.normal(k_x, (B, nY), jnp.float32)

    out = redistribution_forward(x, up_d, across_d, down_d)
    out = jax.block_until_ready(out)
    assert out.shape == (B, nY)

    # Pure-JAX reference of the forward pass: sequential x @ W_k^T on the dense
    # tridiagonal weights, exactly as torch.nn.Linear does.
    weights = build_tridiagonal_weights(
        nX, nY, outgoing_fracs_up, outgoing_fracs_across, outgoing_fracs_down
    )
    ref = x
    for k in range(nX):
        ref = ref @ weights[k].T
    assert jnp.allclose(out, ref, atol=1e-5, rtol=1e-5), "mismatch vs reference"

    # TODO(synk): compute_storage() is a separate method (not forward) and is not
    # implemented as a kernel here.

    print("KERNEL_OK")
</pallas_src>

<mosaic_0001>
module attributes {stable_mosaic.version = 11 : i64} {
  func.func @redistribution_kernel(%arg0: i32, %arg1: memref<16x128xf32, #tpu.memory_space<vmem>>, %arg2: memref<8x16x1xf32, #tpu.memory_space<vmem>>, %arg3: memref<8x16x1xf32, #tpu.memory_space<vmem>>, %arg4: memref<8x16x1xf32, #tpu.memory_space<vmem>>, %arg5: memref<16x128xf32, #tpu.memory_space<vmem>>) attributes {dimension_semantics = [#tpu.dimension_semantics<parallel>], iteration_bounds = array<i64: 2>, scalar_prefetch = 0 : i64, scratch_operands = 0 : i64, tpu.core_type = #tpu.core_type<tc>, window_params = [{transform_indices = @transform_0, window_bounds = array<i64: 16, 128>}, {pipeline_mode = #tpu.pipeline_mode<synchronous>, transform_indices = @transform_1, window_bounds = array<i64: 8, 16, 1>}, {pipeline_mode = #tpu.pipeline_mode<synchronous>, transform_indices = @transform_2, window_bounds = array<i64: 8, 16, 1>}, {pipeline_mode = #tpu.pipeline_mode<synchronous>, transform_indices = @transform_3, window_bounds = array<i64: 8, 16, 1>}, {transform_indices = @transform_4, window_bounds = array<i64: 16, 128>}]} {
    %c0 = arith.constant 0 : index
    %c0_0 = arith.constant 0 : index
    %0 = vector.load %arg1[%c0, %c0_0] : memref<16x128xf32, #tpu.memory_space<vmem>>, vector<16x128xf32>
    %c0_i32 = arith.constant 0 : i32
    %c1_i32 = arith.constant 1 : i32
    %1 = tpu.dynamic_rotate %0 by %c1_i32 dim 0 : vector<16x128xf32>, i32 -> vector<16x128xf32>
    %c15_i32 = arith.constant 15 : i32
    %2 = tpu.dynamic_rotate %0 by %c15_i32 dim 0 : vector<16x128xf32>, i32 -> vector<16x128xf32>
    %3 = arith.index_cast %c0_i32 : i32 to index
    %c0_1 = arith.constant 0 : index
    %c0_2 = arith.constant 0 : index
    %4 = vector.load %arg3[%3, %c0_1, %c0_2] : memref<8x16x1xf32, #tpu.memory_space<vmem>>, vector<1x16x1xf32>
    %5 = vector.shape_cast %4 : vector<1x16x1xf32> to vector<16x1xf32>
    %6 = vector.broadcast %5 : vector<16x1xf32> to vector<16x128xf32>
    %7 = arith.mulf %6, %0 : vector<16x128xf32>
    %8 = arith.index_cast %c0_i32 : i32 to index
    %c0_3 = arith.constant 0 : index
    %c0_4 = arith.constant 0 : index
    %9 = vector.load %arg2[%8, %c0_3, %c0_4] : memref<8x16x1xf32, #tpu.memory_space<vmem>>, vector<1x16x1xf32>
    %10 = vector.shape_cast %9 : vector<1x16x1xf32> to vector<16x1xf32>
    %11 = vector.broadcast %10 : vector<16x1xf32> to vector<16x128xf32>
    %12 = arith.mulf %11, %1 : vector<16x128xf32>
    %13 = arith.addf %7, %12 : vector<16x128xf32>
    %14 = arith.index_cast %c0_i32 : i32 to index
    %c0_5 = arith.constant 0 : index
    %c0_6 = arith.constant 0 : index
    %15 = vector.load %arg4[%14, %c0_5, %c0_6] : memref<8x16x1xf32, #tpu.memory_space<vmem>>, vector<1x16x1xf32>
    %16 = vector.shape_cast %15 : vector<1x16x1xf32> to vector<16x1xf32>
    %17 = vector.broadcast %16 : vector<16x1xf32> to vector<16x128xf32>
    %18 = arith.mulf %17, %2 : vector<16x128xf32>
    %19 = arith.addf %13, %18 : vector<16x128xf32>
    %c1_i32_7 = arith.constant 1 : i32
    %c1_i32_8 = arith.constant 1 : i32
    %20 = tpu.dynamic_rotate %19 by %c1_i32_8 dim 0 : vector<16x128xf32>, i32 -> vector<16x128xf32>
    %c15_i32_9 = arith.constant 15 : i32
    %21 = tpu.dynamic_rotate %19 by %c15_i32_9 dim 0 : vector<16x128xf32>, i32 -> vector<16x128xf32>
    %22 = arith.index_cast %c1_i32_7 : i32 to index
    %c0_10 = arith.constant 0 : index
    %c0_11 = arith.constant 0 : index
    %23 = vector.load %arg3[%22, %c0_10, %c0_11] : memref<8x16x1xf32, #tpu.memory_space<vmem>>, vector<1x16x1xf32>
    %24 = vector.shape_cast %23 : vector<1x16x1xf32> to vector<16x1xf32>
    %25 = vector.broadcast %24 : vector<16x1xf32> to vector<16x128xf32>
    %26 = arith.mulf %25, %19 : vector<16x128xf32>
    %27 = arith.index_cast %c1_i32_7 : i32 to index
    %c0_12 = arith.constant 0 : index
    %c0_13 = arith.constant 0 : index
    %28 = vector.load %arg2[%27, %c0_12, %c0_13] : memref<8x16x1xf32, #tpu.memory_space<vmem>>, vector<1x16x1xf32>
    %29 = vector.shape_cast %28 : vector<1x16x1xf32> to vector<16x1xf32>
    %30 = vector.broadcast %29 : vector<16x1xf32> to vector<16x128xf32>
    %31 = arith.mulf %30, %20 : vector<16x128xf32>
    %32 = arith.addf %26, %31 : vector<16x128xf32>
    %33 = arith.index_cast %c1_i32_7 : i32 to index
    %c0_14 = arith.constant 0 : index
    %c0_15 = arith.constant 0 : index
    %34 = vector.load %arg4[%33, %c0_14, %c0_15] : memref<8x16x1xf32, #tpu.memory_space<vmem>>, vector<1x16x1xf32>
    %35 = vector.shape_cast %34 : vector<1x16x1xf32> to vector<16x1xf32>
    %36 = vector.broadcast %35 : vector<16x1xf32> to vector<16x128xf32>
    %37 = arith.mulf %36, %21 : vector<16x128xf32>
    %38 = arith.addf %32, %37 : vector<16x128xf32>
    %c2_i32 = arith.constant 2 : i32
    %c1_i32_16 = arith.constant 1 : i32
    %39 = tpu.dynamic_rotate %38 by %c1_i32_16 dim 0 : vector<16x128xf32>, i32 -> vector<16x128xf32>
    %c15_i32_17 = arith.constant 15 : i32
    %40 = tpu.dynamic_rotate %38 by %c15_i32_17 dim 0 : vector<16x128xf32>, i32 -> vector<16x128xf32>
    %41 = arith.index_cast %c2_i32 : i32 to index
    %c0_18 = arith.constant 0 : index
    %c0_19 = arith.constant 0 : index
    %42 = vector.load %arg3[%41, %c0_18, %c0_19] : memref<8x16x1xf32, #tpu.memory_space<vmem>>, vector<1x16x1xf32>
    %43 = vector.shape_cast %42 : vector<1x16x1xf32> to vector<16x1xf32>
    %44 = vector.broadcast %43 : vector<16x1xf32> to vector<16x128xf32>
    %45 = arith.mulf %44, %38 : vector<16x128xf32>
    %46 = arith.index_cast %c2_i32 : i32 to index
    %c0_20 = arith.constant 0 : index
    %c0_21 = arith.constant 0 : index
    %47 = vector.load %arg2[%46, %c0_20, %c0_21] : memref<8x16x1xf32, #tpu.memory_space<vmem>>, vector<1x16x1xf32>
    %48 = vector.shape_cast %47 : vector<1x16x1xf32> to vector<16x1xf32>
    %49 = vector.broadcast %48 : vector<16x1xf32> to vector<16x128xf32>
    %50 = arith.mulf %49, %39 : vector<16x128xf32>
    %51 = arith.addf %45, %50 : vector<16x128xf32>
    %52 = arith.index_cast %c2_i32 : i32 to index
    %c0_22 = arith.constant 0 : index
    %c0_23 = arith.constant 0 : index
    %53 = vector.load %arg4[%52, %c0_22, %c0_23] : memref<8x16x1xf32, #tpu.memory_space<vmem>>, vector<1x16x1xf32>
    %54 = vector.shape_cast %53 : vector<1x16x1xf32> to vector<16x1xf32>
    %55 = vector.broadcast %54 : vector<16x1xf32> to vector<16x128xf32>
    %56 = arith.mulf %55, %40 : vector<16x128xf32>
    %57 = arith.addf %51, %56 : vector<16x128xf32>
    %c3_i32 = arith.constant 3 : i32
    %c1_i32_24 = arith.constant 1 : i32
    %58 = tpu.dynamic_rotate %57 by %c1_i32_24 dim 0 : vector<16x128xf32>, i32 -> vector<16x128xf32>
    %c15_i32_25 = arith.constant 15 : i32
    %59 = tpu.dynamic_rotate %57 by %c15_i32_25 dim 0 : vector<16x128xf32>, i32 -> vector<16x128xf32>
    %60 = arith.index_cast %c3_i32 : i32 to index
    %c0_26 = arith.constant 0 : index
    %c0_27 = arith.constant 0 : index
    %61 = vector.load %arg3[%60, %c0_26, %c0_27] : memref<8x16x1xf32, #tpu.memory_space<vmem>>, vector<1x16x1xf32>
    %62 = vector.shape_cast %61 : vector<1x16x1xf32> to vector<16x1xf32>
    %63 = vector.broadcast %62 : vector<16x1xf32> to vector<16x128xf32>
    %64 = arith.mulf %63, %57 : vector<16x128xf32>
    %65 = arith.index_cast %c3_i32 : i32 to index
    %c0_28 = arith.constant 0 : index
    %c0_29 = arith.constant 0 : index
    %66 = vector.load %arg2[%65, %c0_28, %c0_29] : memref<8x16x1xf32, #tpu.memory_space<vmem>>, vector<1x16x1xf32>
    %67 = vector.shape_cast %66 : vector<1x16x1xf32> to vector<16x1xf32>
    %68 = vector.broadcast %67 : vector<16x1xf32> to vector<16x128xf32>
    %69 = arith.mulf %68, %58 : vector<16x128xf32>
    %70 = arith.addf %64, %69 : vector<16x128xf32>
    %71 = arith.index_cast %c3_i32 : i32 to index
    %c0_30 = arith.constant 0 : index
    %c0_31 = arith.constant 0 : index
    %72 = vector.load %arg4[%71, %c0_30, %c0_31] : memref<8x16x1xf32, #tpu.memory_space<vmem>>, vector<1x16x1xf32>
    %73 = vector.shape_cast %72 : vector<1x16x1xf32> to vector<16x1xf32>
    %74 = vector.broadcast %73 : vector<16x1xf32> to vector<16x128xf32>
    %75 = arith.mulf %74, %59 : vector<16x128xf32>
    %76 = arith.addf %70, %75 : vector<16x128xf32>
    %c4_i32 = arith.constant 4 : i32
    %c1_i32_32 = arith.constant 1 : i32
    %77 = tpu.dynamic_rotate %76 by %c1_i32_32 dim 0 : vector<16x128xf32>, i32 -> vector<16x128xf32>
    %c15_i32_33 = arith.constant 15 : i32
    %78 = tpu.dynamic_rotate %76 by %c15_i32_33 dim 0 : vector<16x128xf32>, i32 -> vector<16x128xf32>
    %79 = arith.index_cast %c4_i32 : i32 to index
    %c0_34 = arith.constant 0 : index
    %c0_35 = arith.constant 0 : index
    %80 = vector.load %arg3[%79, %c0_34, %c0_35] : memref<8x16x1xf32, #tpu.memory_space<vmem>>, vector<1x16x1xf32>
    %81 = vector.shape_cast %80 : vector<1x16x1xf32> to vector<16x1xf32>
    %82 = vector.broadcast %81 : vector<16x1xf32> to vector<16x128xf32>
    %83 = arith.mulf %82, %76 : vector<16x128xf32>
    %84 = arith.index_cast %c4_i32 : i32 to index
    %c0_36 = arith.constant 0 : index
    %c0_37 = arith.constant 0 : index
    %85 = vector.load %arg2[%84, %c0_36, %c0_37] : memref<8x16x1xf32, #tpu.memory_space<vmem>>, vector<1x16x1xf32>
    %86 = vector.shape_cast %85 : vector<1x16x1xf32> to vector<16x1xf32>
    %87 = vector.broadcast %86 : vector<16x1xf32> to vector<16x128xf32>
    %88 = arith.mulf %87, %77 : vector<16x128xf32>
    %89 = arith.addf %83, %88 : vector<16x128xf32>
    %90 = arith.index_cast %c4_i32 : i32 to index
    %c0_38 = arith.constant 0 : index
    %c0_39 = arith.constant 0 : index
    %91 = vector.load %arg4[%90, %c0_38, %c0_39] : memref<8x16x1xf32, #tpu.memory_space<vmem>>, vector<1x16x1xf32>
    %92 = vector.shape_cast %91 : vector<1x16x1xf32> to vector<16x1xf32>
    %93 = vector.broadcast %92 : vector<16x1xf32> to vector<16x128xf32>
    %94 = arith.mulf %93, %78 : vector<16x128xf32>
    %95 = arith.addf %89, %94 : vector<16x128xf32>
    %c5_i32 = arith.constant 5 : i32
    %c1_i32_40 = arith.constant 1 : i32
    %96 = tpu.dynamic_rotate %95 by %c1_i32_40 dim 0 : vector<16x128xf32>, i32 -> vector<16x128xf32>
    %c15_i32_41 = arith.constant 15 : i32
    %97 = tpu.dynamic_rotate %95 by %c15_i32_41 dim 0 : vector<16x128xf32>, i32 -> vector<16x128xf32>
    %98 = arith.index_cast %c5_i32 : i32 to index
    %c0_42 = arith.constant 0 : index
    %c0_43 = arith.constant 0 : index
    %99 = vector.load %arg3[%98, %c0_42, %c0_43] : memref<8x16x1xf32, #tpu.memory_space<vmem>>, vector<1x16x1xf32>
    %100 = vector.shape_cast %99 : vector<1x16x1xf32> to vector<16x1xf32>
    %101 = vector.broadcast %100 : vector<16x1xf32> to vector<16x128xf32>
    %102 = arith.mulf %101, %95 : vector<16x128xf32>
    %103 = arith.index_cast %c5_i32 : i32 to index
    %c0_44 = arith.constant 0 : index
    %c0_45 = arith.constant 0 : index
    %104 = vector.load %arg2[%103, %c0_44, %c0_45] : memref<8x16x1xf32, #tpu.memory_space<vmem>>, vector<1x16x1xf32>
    %105 = vector.shape_cast %104 : vector<1x16x1xf32> to vector<16x1xf32>
    %106 = vector.broadcast %105 : vector<16x1xf32> to vector<16x128xf32>
    %107 = arith.mulf %106, %96 : vector<16x128xf32>
    %108 = arith.addf %102, %107 : vector<16x128xf32>
    %109 = arith.index_cast %c5_i32 : i32 to index
    %c0_46 = arith.constant 0 : index
    %c0_47 = arith.constant 0 : index
    %110 = vector.load %arg4[%109, %c0_46, %c0_47] : memref<8x16x1xf32, #tpu.memory_space<vmem>>, vector<1x16x1xf32>
    %111 = vector.shape_cast %110 : vector<1x16x1xf32> to vector<16x1xf32>
    %112 = vector.broadcast %111 : vector<16x1xf32> to vector<16x128xf32>
    %113 = arith.mulf %112, %97 : vector<16x128xf32>
    %114 = arith.addf %108, %113 : vector<16x128xf32>
    %c6_i32 = arith.constant 6 : i32
    %c1_i32_48 = arith.constant 1 : i32
    %115 = tpu.dynamic_rotate %114 by %c1_i32_48 dim 0 : vector<16x128xf32>, i32 -> vector<16x128xf32>
    %c15_i32_49 = arith.constant 15 : i32
    %116 = tpu.dynamic_rotate %114 by %c15_i32_49 dim 0 : vector<16x128xf32>, i32 -> vector<16x128xf32>
    %117 = arith.index_cast %c6_i32 : i32 to index
    %c0_50 = arith.constant 0 : index
    %c0_51 = arith.constant 0 : index
    %118 = vector.load %arg3[%117, %c0_50, %c0_51] : memref<8x16x1xf32, #tpu.memory_space<vmem>>, vector<1x16x1xf32>
    %119 = vector.shape_cast %118 : vector<1x16x1xf32> to vector<16x1xf32>
    %120 = vector.broadcast %119 : vector<16x1xf32> to vector<16x128xf32>
    %121 = arith.mulf %120, %114 : vector<16x128xf32>
    %122 = arith.index_cast %c6_i32 : i32 to index
    %c0_52 = arith.constant 0 : index
    %c0_53 = arith.constant 0 : index
    %123 = vector.load %arg2[%122, %c0_52, %c0_53] : memref<8x16x1xf32, #tpu.memory_space<vmem>>, vector<1x16x1xf32>
    %124 = vector.shape_cast %123 : vector<1x16x1xf32> to vector<16x1xf32>
    %125 = vector.broadcast %124 : vector<16x1xf32> to vector<16x128xf32>
    %126 = arith.mulf %125, %115 : vector<16x128xf32>
    %127 = arith.addf %121, %126 : vector<16x128xf32>
    %128 = arith.index_cast %c6_i32 : i32 to index
    %c0_54 = arith.constant 0 : index
    %c0_55 = arith.constant 0 : index
    %129 = vector.load %arg4[%128, %c0_54, %c0_55] : memref<8x16x1xf32, #tpu.memory_space<vmem>>, vector<1x16x1xf32>
    %130 = vector.shape_cast %129 : vector<1x16x1xf32> to vector<16x1xf32>
    %131 = vector.broadcast %130 : vector<16x1xf32> to vector<16x128xf32>
    %132 = arith.mulf %131, %116 : vector<16x128xf32>
    %133 = arith.addf %127, %132 : vector<16x128xf32>
    %c7_i32 = arith.constant 7 : i32
    %c1_i32_56 = arith.constant 1 : i32
    %134 = tpu.dynamic_rotate %133 by %c1_i32_56 dim 0 : vector<16x128xf32>, i32 -> vector<16x128xf32>
    %c15_i32_57 = arith.constant 15 : i32
    %135 = tpu.dynamic_rotate %133 by %c15_i32_57 dim 0 : vector<16x128xf32>, i32 -> vector<16x128xf32>
    %136 = arith.index_cast %c7_i32 : i32 to index
    %c0_58 = arith.constant 0 : index
    %c0_59 = arith.constant 0 : index
    %137 = vector.load %arg3[%136, %c0_58, %c0_59] : memref<8x16x1xf32, #tpu.memory_space<vmem>>, vector<1x16x1xf32>
    %138 = vector.shape_cast %137 : vector<1x16x1xf32> to vector<16x1xf32>
    %139 = vector.broadcast %138 : vector<16x1xf32> to vector<16x128xf32>
    %140 = arith.mulf %139, %133 : vector<16x128xf32>
    %141 = arith.index_cast %c7_i32 : i32 to index
    %c0_60 = arith.constant 0 : index
    %c0_61 = arith.constant 0 : index
    %142 = vector.load %arg2[%141, %c0_60, %c0_61] : memref<8x16x1xf32, #tpu.memory_space<vmem>>, vector<1x16x1xf32>
    %143 = vector.shape_cast %142 : vector<1x16x1xf32> to vector<16x1xf32>
    %144 = vector.broadcast %143 : vector<16x1xf32> to vector<16x128xf32>
    %145 = arith.mulf %144, %134 : vector<16x128xf32>
    %146 = arith.addf %140, %145 : vector<16x128xf32>
    %147 = arith.index_cast %c7_i32 : i32 to index
    %c0_62 = arith.constant 0 : index
    %c0_63 = arith.constant 0 : index
    %148 = vector.load %arg4[%147, %c0_62, %c0_63] : memref<8x16x1xf32, #tpu.memory_space<vmem>>, vector<1x16x1xf32>
    %149 = vector.shape_cast %148 : vector<1x16x1xf32> to vector<16x1xf32>
    %150 = vector.broadcast %149 : vector<16x1xf32> to vector<16x128xf32>
    %151 = arith.mulf %150, %135 : vector<16x128xf32>
    %152 = arith.addf %146, %151 : vector<16x128xf32>
    %c8_i32 = arith.constant 8 : i32
    %c0_64 = arith.constant 0 : index
    %c0_65 = arith.constant 0 : index
    %153 = vector.load %arg5[%c0_64, %c0_65] : memref<16x128xf32, #tpu.memory_space<vmem>>, vector<16x128xf32>
    tpu.vector_store %arg5[%c0_64, %c0_65], %152 {strides = array<i32>} : memref<16x128xf32, #tpu.memory_space<vmem>>, vector<16x128xf32>,
    return
  }
  func.func @transform_0(%arg0: i32) -> (i32, i32) {
    %c0_i32 = arith.constant 0 : i32
    %c0_i32_0 = arith.constant 0 : i32
    return %c0_i32, %arg0 : i32, i32
  }
  func.func @transform_1(%arg0: i32) -> (i32, i32, i32) {
    %c0_i32 = arith.constant 0 : i32
    %c0_i32_0 = arith.constant 0 : i32
    %c0_i32_1 = arith.constant 0 : i32
    %c0_i32_2 = arith.constant 0 : i32
    return %c0_i32, %c0_i32_0, %c0_i32_1 : i32, i32, i32
  }
  func.func @transform_2(%arg0: i32) -> (i32, i32, i32) {
    %c0_i32 = arith.constant 0 : i32
    %c0_i32_0 = arith.constant 0 : i32
    %c0_i32_1 = arith.constant 0 : i32
    %c0_i32_2 = arith.constant 0 : i32
    return %c0_i32, %c0_i32_0, %c0_i32_1 : i32, i32, i32
  }
  func.func @transform_3(%arg0: i32) -> (i32, i32, i32) {
    %c0_i32 = arith.constant 0 : i32
    %c0_i32_0 = arith.constant 0 : i32
    %c0_i32_1 = arith.constant 0 : i32
    %c0_i32_2 = arith.constant 0 : i32
    return %c0_i32, %c0_i32_0, %c0_i32_1 : i32, i32, i32
  }
  func.func @transform_4(%arg0: i32) -> (i32, i32) {
    %c0_i32 = arith.constant 0 : i32
    %c0_i32_0 = arith.constant 0 : i32
    return %c0_i32, %arg0 : i32, i32
  }
}

</mosaic_0001>

<llo_original>
// kernel: tpu_custom_call.1
$region0: #{tpu_custom_call.1}
  #allocation0 [shape = 'u32[]', space=smem, size = 0x4, offset = 0x4, fixed_abs, tag = 'smem constant byte address 0x4 - core index']
  #allocation1 [shape = 'u32[144,128]{1,0:T(1,128)}', space=vmem, size = 0x12000, scoped, tag = 'internal scratch']
  %s0 = inlined_call_operand.vmem [shape: f32[16,256], index: 0, kind: input, shape index: {}]
  %s1 = inlined_call_operand.vmem [shape: f32[8,16,1], index: 1, kind: input, shape index: {}]
  %s2 = inlined_call_operand.vmem [shape: f32[8,16,1], index: 2, kind: input, shape index: {}]
  %s3 = inlined_call_operand.vmem [shape: f32[8,16,1], index: 3, kind: input, shape index: {}]
  %s4 = inlined_call_operand.hbm [shape: f32[16,256], index: 4, kind: output, shape index: {}]
  %s5 = sld [smem:[#allocation0]]
  $region87: #{tpu_custom_call.1} parent=0
    _
  %s7 = ssub.s32 1, %s5
  %s8 = scalar_select 0, %s7, %s5
  $region1: #{tpu_custom_call.1} parent=0
    #allocation2 [shape = 'u8[16384]{0}', space=vmem, size = 0x4000, scoped, tag = 'input window, operand 0']
    #allocation3 [shape = 'u8[16384]{0}', space=vmem, size = 0x4000, scoped, tag = 'output window, operand 0']
    #allocation4 [shape = 's32[2]{0}', space=sflag, size = 0x8, scoped, tag = 'scoped memory for tpu_custom_call.1']
    %9 = vsyncpa [#allocation4], 0
    %s10 = scalar_lea.sflag [#allocation4], 1
    %11 = vsyncpa %s10, 0
    loop: start=0, step=1, limit=4
    $region2: #{tpu_custom_call.1} parent=1 // loop_pre_header
      _
    $region3: #{tpu_custom_call.1} parent=1 // loop_header
      %s13 = sphi 0, %s17
      %p14 = scmp.ge.s32.totalorder %s13, 4
      %s23 = sphi 0, %s25
      %s26 = sphi 0, %s23
      %s27 = sphi 0, %s26
      %s43 = sphi 0, %s27
      %s47 = sphi 0, %s47
      %s49 = sphi 0, %s47
      %s50 = sphi 0, %s49
      %s64 = sphi 0, %s50
      %s68 = sphi 0, %s68
      %s70 = sphi 0, %s68
      %s71 = sphi 0, %s70
      %s85 = sphi 0, %s71
      %s89 = sphi 0, %s89
      %s91 = sphi 0, %s89
      %s92 = sphi 0, %s91
      %s106 = sphi 0, %s92
      %s112 = sphi 0, %s114
      %s115 = sphi 0, %s112
      %s116 = sphi 0, %s115
      %s132 = sphi 0, %s116
    $region4: #{tpu_custom_call.1} parent=1 // loop_header_branch
      %16 = sbr.rel (%p14) target = $region8
    $region5: #{tpu_custom_call.1} parent=1 // loop_body
      %s18 = ssub.s32 %s13, 1
      %s19 = ssub.s32 %s13, 2
      %s20 = sadd.s32 %s13, 1
      %s21 = ssub.s32 %s13, %s20
      %p22 = scmp.eq.s32.totalorder %s21, 0
      %s24 = sadd.s32 %s23, 1
      %s25 = scalar_select %p22, %s23, %s24
      %p28 = pneg %p22
      %p29 = scmp.eq.s32.totalorder %s13, 1
      %p30 = por %p28, %p29
      %p31 = scmp.ne.s32.totalorder %s23, %s26
      %p32 = scmp.eq.s32.totalorder %s13, 0
      %p33 = por %p31, %p32
      %p34 = scmp.ne.s32.totalorder %s23, %s26
      %p35 = scmp.eq.s32.totalorder %s18, 1
      %p36 = por %p34, %p35
      %p37 = scmp.ne.s32.totalorder %s26, %s27
      %p38 = scmp.eq.s32.totalorder %s18, 0
      %p39 = por %p37, %p38
      %p40 = scmp.ne.s32.totalorder %s26, %s27
      %p41 = scmp.eq.s32.totalorder %s19, 1
      %p42 = por %p40, %p41
      %p44 = scmp.ne.s32.totalorder %s27, %s43
      %p45 = scmp.eq.s32.totalorder %s19, 0
      %p46 = por %p44, %p45
      %s48 = sadd.s32 %s47, 1
      %p51 = scmp.eq.s32.totalorder %s13, 1
      %p52 = scmp.ne.s32.totalorder %s47, %s49
      %p53 = scmp.eq.s32.totalorder %s13, 0
      %p54 = por %p52, %p53
      %p55 = scmp.ne.s32.totalorder %s47, %s49
      %p56 = scmp.eq.s32.totalorder %s18, 1
      %p57 = por %p55, %p56
      %p58 = scmp.ne.s32.totalorder %s49, %s50
      %p59 = scmp.eq.s32.totalorder %s18, 0
      %p60 = por %p58, %p59
      %p61 = scmp.ne.s32.totalorder %s49, %s50
      %p62 = scmp.eq.s32.totalorder %s19, 1
      %p63 = por %p61, %p62
      %p65 = scmp.ne.s32.totalorder %s50, %s64
      %p66 = scmp.eq.s32.totalorder %s19, 0
      %p67 = por %p65, %p66
      %s69 = sadd.s32 %s68, 1
      %p72 = scmp.eq.s32.totalorder %s13, 1
      %p73 = scmp.ne.s32.totalorder %s68, %s70
      %p74 = scmp.eq.s32.totalorder %s13, 0
      %p75 = por %p73, %p74
      %p76 = scmp.ne.s32.totalorder %s68, %s70
      %p77 = scmp.eq.s32.totalorder %s18, 1
      %p78 = por %p76, %p77
      %p79 = scmp.ne.s32.totalorder %s70, %s71
      %p80 = scmp.eq.s32.totalorder %s18, 0
      %p81 = por %p79, %p80
      %p82 = scmp.ne.s32.totalorder %s70, %s71
      %p83 = scmp.eq.s32.totalorder %s19, 1
      %p84 = por %p82, %p83
      %p86 = scmp.ne.s32.totalorder %s71, %s85
      %p87 = scmp.eq.s32.totalorder %s19, 0
      %p88 = por %p86, %p87
      %s90 = sadd.s32 %s89, 1
      %p93 = scmp.eq.s32.totalorder %s13, 1
      %p94 = scmp.ne.s32.totalorder %s89, %s91
      %p95 = scmp.eq.s32.totalorder %s13, 0
      %p96 = por %p94, %p95
      %p97 = scmp.ne.s32.totalorder %s89, %s91
      %p98 = scmp.eq.s32.totalorder %s18, 1
      %p99 = por %p97, %p98
      %p100 = scmp.ne.s32.totalorder %s91, %s92
      %p101 = scmp.eq.s32.totalorder %s18, 0
      %p102 = por %p100, %p101
      %p103 = scmp.ne.s32.totalorder %s91, %s92
      %p104 = scmp.eq.s32.totalorder %s19, 1
      %p105 = por %p103, %p104
      %p107 = scmp.ne.s32.totalorder %s92, %s106
      %p108 = scmp.eq.s32.totalorder %s19, 0
      %p109 = por %p107, %p108
      %s110 = ssub.s32 %s13, %s20
      %p111 = scmp.eq.s32.totalorder %s110, 0
      %s113 = sadd.s32 %s112, 1
      %s114 = scalar_select %p111, %s112, %s113
      %p117 = pneg %p111
      %p118 = scmp.eq.s32.totalorder %s13, 1
      %p119 = por %p117, %p118
      %p120 = scmp.ne.s32.totalorder %s112, %s115
      %p121 = scmp.eq.s32.totalorder %s13, 0
      %p122 = por %p120, %p121
      %p123 = scmp.ne.s32.totalorder %s112, %s115
      %p124 = scmp.eq.s32.totalorder %s18, 1
      %p125 = por %p123, %p124
      %p126 = scmp.ne.s32.totalorder %s115, %s116
      %p127 = scmp.eq.s32.totalorder %s18, 0
      %p128 = por %p126, %p127
      %p129 = scmp.ne.s32.totalorder %s115, %s116
      %p130 = scmp.eq.s32.totalorder %s19, 1
      %p131 = por %p129, %p130
      %p133 = scmp.ne.s32.totalorder %s116, %s132
      %p134 = scmp.eq.s32.totalorder %s19, 0
      %p135 = por %p133, %p134
      %p136 = scmp.le.s32.totalorder 1, %s13
      %p137 = scmp.lt.s32.totalorder %s13, 3
      %p138 = pnand %p136, %p137
      %p139 = pneg %p138
      // Predicated region
      $region9: #{tpu_custom_call.1} parent=5 // pred_check
        _
      $region10: #{tpu_custom_call.1} parent=5 // pred_check_branch
        %141 = sbr.rel (%p138) target = $region12
      $region11: #{tpu_custom_call.1} parent=5 // pred_region
        %s142 = ssub.s32 %s13, 1
        // Predicated region
        $region13: #{tpu_custom_call.1} parent=11 // pred_check
          %p143 = pneg %p60
        $region14: #{tpu_custom_call.1} parent=11 // pred_check_branch
          %145 = sbr.rel (%p143) target = $region16
        $region15: #{tpu_custom_call.1} parent=11 // pred_region
          _
        $region16: #{tpu_custom_call.1} parent=11 // pred_fallthru
          _
        // Predicated region
        $region17: #{tpu_custom_call.1} parent=11 // pred_check
          %p146 = pneg %p81
        $region18: #{tpu_custom_call.1} parent=11 // pred_check_branch
          %148 = sbr.rel (%p146) target = $region20
        $region19: #{tpu_custom_call.1} parent=11 // pred_region
          _
        $region20: #{tpu_custom_call.1} parent=11 // pred_fallthru
          _
        // Predicated region
        $region21: #{tpu_custom_call.1} parent=11 // pred_check
          %p149 = pneg %p102
        $region22: #{tpu_custom_call.1} parent=11 // pred_check_branch
          %151 = sbr.rel (%p149) target = $region24
        $region23: #{tpu_custom_call.1} parent=11 // pred_region
          _
        $region24: #{tpu_custom_call.1} parent=11 // pred_fallthru
          _
      $region12: #{tpu_custom_call.1} parent=5 // pred_fallthru
        _
      %p152 = scmp.lt.s32.totalorder %s13, 2
      // Predicated region
      $region25: #{tpu_custom_call.1} parent=5 // pred_check
        %p153 = pneg %p152
      $region26: #{tpu_custom_call.1} parent=5 // pred_check_branch
        %155 = sbr.rel (%p153) target = $region28
      $region27: #{tpu_custom_call.1} parent=5 // pred_region
        // Predicated region
        $region29: #{tpu_custom_call.1} parent=27 // pred_check
          %p156 = pneg %p33
        $region30: #{tpu_custom_call.1} parent=27 // pred_check_branch
          %158 = sbr.rel (%p156) target = $region32
        $region31: #{tpu_custom_call.1} parent=27 // pred_region
          %s159 = sand.u32 %s23, 1
          %s160 = sand.u32 %s23, 1
          %s161 = smul.addr %s160, 16
          %s162 = scalar_lea.vmem [#allocation2], %s161
          %s163 = smul.addr %s13, 8
          %s164 = scalar_lea.vmem %s0, %s163
          // Predicated region
          $region33: #{tpu_custom_call.1} parent=31 // pred_check
            _
          $region34: #{tpu_custom_call.1} parent=31 // pred_check_branch
            %166 = sbr.rel (0) target = $region36
          $region35: #{tpu_custom_call.1} parent=31 // pred_region
            // Predicated region
            $region37: #{tpu_custom_call.1} parent=35 // pred_check
              _
            $region38: #{tpu_custom_call.1} parent=35 // pred_check_branch
              %168 = sbr.rel (0) target = $region40
            $region39: #{tpu_custom_call.1} parent=35 // pred_region
              // Predicated region
              $region52: #{tpu_custom_call.1} parent=39 // pred_check
                _
              $region53: #{tpu_custom_call.1} parent=39 // pred_check_branch
                %186 = sbr.rel (0) target = $region55
              $region54: #{tpu_custom_call.1} parent=39 // pred_region
                loop: start=0, step=1, limit=1
                $region56: #{tpu_custom_call.1} parent=54 // loop_pre_header
                  _
                $region57: #{tpu_custom_call.1} parent=54 // loop_header
                  %s188 = sphi 0, %s192
                  %p189 = scmp.ge.s32.totalorder %s188, 1
                  %s193 = sphi %s164, %s164
                  %s194 = sphi %s162, %s162
                $region58: #{tpu_custom_call.1} parent=54 // loop_header_branch
                  %191 = sbr.rel (%p189) target = $region62
                $region59: #{tpu_custom_call.1} parent=54 // loop_body
                  %v195 = vld [vmem:[%s193] sm:$0xff]
                  %196 = vst [vmem:[%s194] sm:$0xff] %v195
                  %v197 = vld [vmem:[%s193 + $0x10] sm:$0xff]
                  %198 = vst [vmem:[%s194 + $0x8] sm:$0xff] %v197
                $region60: #{tpu_custom_call.1} parent=54 // loop_footer
                  %s192 = sadd.s32 1, %s188
                $region61: #{tpu_custom_call.1} parent=54 // loop_footer_branch
                  %187 = sbr.rel target = $region57
                $region62: #{tpu_custom_call.1} parent=54 // loop_exit
                  _
              $region55: #{tpu_custom_call.1} parent=39 // pred_fallthru
                _
              // Predicated region
              $region63: #{tpu_custom_call.1} parent=39 // pred_check
                _
              $region64: #{tpu_custom_call.1} parent=39 // pred_check_branch
                %200 = sbr.rel target = $region66
              $region65: #{tpu_custom_call.1} parent=39 // pred_region
                _
              $region66: #{tpu_custom_call.1} parent=39 // pred_fallthru
                _
            $region40: #{tpu_custom_call.1} parent=35 // pred_fallthru
              _
            // Predicated region
            $region41: #{tpu_custom_call.1} parent=35 // pred_check
              _
            $region42: #{tpu_custom_call.1} parent=35 // pred_check_branch
              %170 = sbr.rel target = $region44
            $region43: #{tpu_custom_call.1} parent=35 // pred_region
              %s172 = ssub.s32 256, 1
              loop: start=0, step=1, limit=1
              $region45: #{tpu_custom_call.1} parent=43 // loop_pre_header
                _
              $region46: #{tpu_custom_call.1} parent=43 // loop_header
                %s174 = sphi 0, %s178
                %p175 = scmp.ge.s32.totalorder %s174, 1
                %s179 = sphi %s164, %s164
                %s180 = sphi %s162, %s162
              $region47: #{tpu_custom_call.1} parent=43 // loop_header_branch
                %177 = sbr.rel (%p175) target = $region51
              $region48: #{tpu_custom_call.1} parent=43 // loop_body
                %v181 = vld [vmem:[%s179] sm:%s172]
                %182 = vst [vmem:[%s180] sm:%s172] %v181
                %v183 = vld [vmem:[%s179 + $0x10] sm:%s172]
                %184 = vst [vmem:[%s180 + $0x8] sm:%s172] %v183
              $region49: #{tpu_custom_call.1} parent=43 // loop_footer
                %s178 = sadd.s32 1, %s174
              $region50: #{tpu_custom_call.1} parent=43 // loop_footer_branch
                %173 = sbr.rel target = $region46
              $region51: #{tpu_custom_call.1} parent=43 // loop_exit
                _
            $region44: #{tpu_custom_call.1} parent=35 // pred_fallthru
              _
          $region36: #{tpu_custom_call.1} parent=31 // pred_fallthru
            _
          %201 = vnop
        $region32: #{tpu_custom_call.1} parent=27 // pred_fallthru
          _
      $region28: #{tpu_custom_call.1} parent=5 // pred_fallthru
        _
      %p202 = scmp.le.s32.totalorder 1, %s13
      %p203 = scmp.lt.s32.totalorder %s13, 3
      %p204 = pnand %p202, %p203
      %p205 = pneg %p204
      // Predicated region
      $region67: #{tpu_custom_call.1} parent=5 // pred_check
        _
      $region68: #{tpu_custom_call.1} parent=5 // pred_check_branch
        %207 = sbr.rel (%p204) target = $region70
      $region69: #{tpu_custom_call.1} parent=5 // pred_region
        %s208 = ssub.s32 %s13, 1
        %s209 = sand.u32 %s26, 1
        %s210 = sand.u32 %s26, 1
        %s211 = smul.addr %s210, 16
        %s212 = scalar_lea.vmem [#allocation2], %s211
        // Predicated region
        $region71: #{tpu_custom_call.1} parent=69 // pred_check
          %p213 = pneg %p39
        $region72: #{tpu_custom_call.1} parent=69 // pred_check_branch
          %215 = sbr.rel (%p213) target = $region74
        $region73: #{tpu_custom_call.1} parent=69 // pred_region
          _
        $region74: #{tpu_custom_call.1} parent=69 // pred_fallthru
          _
        %s216 = sand.u32 %s26, 1
        %s217 = sand.u32 %s26, 1
        %s218 = smul.addr %s217, 16
        %s219 = scalar_lea.vmem [#allocation2], %s218
        %p220 = pneg %p39
        %p221 = pneg %p36
        %p222 = pneg %p60
        %p223 = pneg %p57
        %p224 = pneg %p81
        %p225 = pneg %p78
        %p226 = pneg %p102
        %p227 = pneg %p99
        %p228 = pneg %p128
        %p229 = pneg %p125
        %s230 = sand.u32 %s115, 1
        %s231 = scalar_lea.sflag [#allocation4], %s230
        %s232 = sand.u32 %s115, 1
        %s233 = smul.addr %s232, 16
        %s234 = scalar_lea.vmem [#allocation3], %s233
        %v235 = vld [vmem:[%s212] sm:$0xff]
        %v236 = vld [vmem:[%s212 + $0x8] sm:$0xff]
        %v237 = vrot.slane %v235, 7
        %v238 = vrot.slane %v236, 7
        %v239 = vlaneseq
        %v240 = vshrl.u32 %v239, 7
        %vm241 = vcmp.lt.s32.totalorder %v240, 1
        %v242 = vsel %vm241, %v237, %v238
        %v243 = vsel %vm241, %v238, %v237
        %v244 = vrot.slane %v235, 1
        %v245 = vrot.slane %v236, 1
        %vm246 = vcmp.lt.s32.totalorder %v240, 7
        %v247 = vsel %vm246, %v244, %v245
        %v248 = vsel %vm246, %v245, %v244
        %v249 = vld [vmem:[%s2] sm:$0xff]
        %v250 = vld [vmem:[%s2 + $0x8] sm:$0xff]
        %252 = vset.pattern.permute.xlu0 0
        %253 = vperm.xlu0 %252, %v249
        %v254 = vpop.permute.xlu0 %253
        %257 = vset.pattern.permute.xlu0 0
        %258 = vperm.xlu0 %257, %v250
        %v259 = vpop.permute.xlu0 %258
        %v261 = vmul.f32 %v254, %v235
        %v262 = vmul.f32 %v259, %v236
        %v263 = vld [vmem:[%s1] sm:$0xff]
        %v264 = vld [vmem:[%s1 + $0x8] sm:$0xff]
        %266 = vset.pattern.permute.xlu0 0
        %267 = vperm.xlu0 %266, %v263
        %v268 = vpop.permute.xlu0 %267
        %271 = vset.pattern.permute.xlu0 0
        %272 = vperm.xlu0 %271, %v264
        %v273 = vpop.permute.xlu0 %272
        %v275 = vmul.f32 %v268, %v243
        %v276 = vmul.f32 %v273, %v242
        %v277 = vadd.f32 %v261, %v275
        %v278 = vadd.f32 %v262, %v276
        %v279 = vld [vmem:[%s3] sm:$0xff]
        %v280 = vld [vmem:[%s3 + $0x8] sm:$0xff]
        %282 = vset.pattern.permute.xlu0 0
        %283 = vperm.xlu0 %282, %v279
        %v284 = vpop.permute.xlu0 %283
        %287 = vset.pattern.permute.xlu0 0
        %288 = vperm.xlu0 %287, %v280
        %v289 = vpop.permute.xlu0 %288
        %v291 = vmul.f32 %v284, %v247
        %v292 = vmul.f32 %v289, %v248
        %v293 = vadd.f32 %v277, %v291
        %v294 = vadd.f32 %v278, %v292
        %v295 = vrot.slane %v293, 7
        %v296 = vrot.slane %v294, 7
        %v297 = vsel %vm241, %v295, %v296
        %v298 = vsel %vm241, %v296, %v295
        %v299 = vrot.slane %v293, 1
        %v300 = vrot.slane %v294, 1
        %v301 = vsel %vm246, %v299, %v300
        %v302 = vsel %vm246, %v300, %v299
        %s303 = scalar_lea.vmem %s2, 16
        %v304 = vld [vmem:[%s303] sm:$0xff]
        %v305 = vld [vmem:[%s303 + $0x8] sm:$0xff]
        %307 = vset.pattern.permute.xlu0 0
        %308 = vperm.xlu0 %307, %v304
        %v309 = vpop.permute.xlu0 %308
        %312 = vset.pattern.permute.xlu0 0
        %313 = vperm.xlu0 %312, %v305
        %v314 = vpop.permute.xlu0 %313
        %v316 = vmul.f32 %v309, %v293
        %v317 = vmul.f32 %v314, %v294
        %s318 = scalar_lea.vmem %s1, 16
        %v319 = vld [vmem:[%s318] sm:$0xff]
        %v320 = vld [vmem:[%s318 + $0x8] sm:$0xff]
        %322 = vset.pattern.permute.xlu0 0
        %323 = vperm.xlu0 %322, %v319
        %v324 = vpop.permute.xlu0 %323
        %327 = vset.pattern.permute.xlu0 0
        %328 = vperm.xlu0 %327, %v320
        %v329 = vpop.permute.xlu0 %328
        %v331 = vmul.f32 %v324, %v298
        %v332 = vmul.f32 %v329, %v297
        %v333 = vadd.f32 %v316, %v331
        %v334 = vadd.f32 %v317, %v332
        %s335 = scalar_lea.vmem %s3, 16
        %v336 = vld [vmem:[%s335] sm:$0xff]
        %v337 = vld [vmem:[%s335 + $0x8] sm:$0xff]
        %339 = vset.pattern.permute.xlu0 0
        %340 = vperm.xlu0 %339, %v336
        %v341 = vpop.permute.xlu0 %340
        %344 = vset.pattern.permute.xlu0 0
        %345 = vperm.xlu0 %344, %v337
        %v346 = vpop.permute.xlu0 %345
        %v348 = vmul.f32 %v341, %v301
        %v349 = vmul.f32 %v346, %v302
        %v350 = vadd.f32 %v333, %v348
        %v351 = vadd.f32 %v334, %v349
        %v352 = vrot.slane %v350, 7
        %v353 = vrot.slane %v351, 7
        %v354 = vsel %vm241, %v352, %v353
        %v355 = vsel %vm241, %v353, %v352
        %v356 = vrot.slane %v350, 1
        %v357 = vrot.slane %v351, 1
        %v358 = vsel %vm246, %v356, %v357
        %v359 = vsel %vm246, %v357, %v356
        %s360 = scalar_lea.vmem %s2, 32
        %v361 = vld [vmem:[%s360] sm:$0xff]
        %v362 = vld [vmem:[%s360 + $0x8] sm:$0xff]
        %364 = vset.pattern.permute.xlu0 0
        %365 = vperm.xlu0 %364, %v361
        %v366 = vpop.permute.xlu0 %365
        %369 = vset.pattern.permute.xlu0 0
        %370 = vperm.xlu0 %369, %v362
        %v371 = vpop.permute.xlu0 %370
        %v373 = vmul.f32 %v366, %v350
        %v374 = vmul.f32 %v371, %v351
        %s375 = scalar_lea.vmem %s1, 32
        %v376 = vld [vmem:[%s375] sm:$0xff]
        %v377 = vld [vmem:[%s375 + $0x8] sm:$0xff]
        %379 = vset.pattern.permute.xlu0 0
        %380 = vperm.xlu0 %379, %v376
        %v381 = vpop.permute.xlu0 %380
        %384 = vset.pattern.permute.xlu0 0
        %385 = vperm.xlu0 %384, %v377
        %v386 = vpop.permute.xlu0 %385
        %v388 = vmul.f32 %v381, %v355
        %v389 = vmul.f32 %v386, %v354
        %v390 = vadd.f32 %v373, %v388
        %v391 = vadd.f32 %v374, %v389
        %s392 = scalar_lea.vmem %s3, 32
        %v393 = vld [vmem:[%s392] sm:$0xff]
        %v394 = vld [vmem:[%s392 + $0x8] sm:$0xff]
        %396 = vset.pattern.permute.xlu0 0
        %397 = vperm.xlu0 %396, %v393
        %v398 = vpop.permute.xlu0 %397
        %401 = vset.pattern.permute.xlu0 0
        %402 = vperm.xlu0 %401, %v394
        %v403 = vpop.permute.xlu0 %402
        %v405 = vmul.f32 %v398, %v358
        %v406 = vmul.f32 %v403, %v359
        %v407 = vadd.f32 %v390, %v405
        %v408 = vadd.f32 %v391, %v406
        %v409 = vrot.slane %v407, 7
        %v410 = vrot.slane %v408, 7
        %v411 = vsel %vm241, %v409, %v410
        %v412 = vsel %vm241, %v410, %v409
        %v413 = vrot.slane %v407, 1
        %v414 = vrot.slane %v408, 1
        %v415 = vsel %vm246, %v413, %v414
        %v416 = vsel %vm246, %v414, %v413
        %s417 = scalar_lea.vmem %s2, 48
        %v418 = vld [vmem:[%s417] sm:$0xff]
        %v419 = vld [vmem:[%s417 + $0x8] sm:$0xff]
        %421 = vset.pattern.permute.xlu0 0
        %422 = vperm.xlu0 %421, %v418
        %v423 = vpop.permute.xlu0 %422
        %426 = vset.pattern.permute.xlu0 0
        %427 = vperm.xlu0 %426, %v419
        %v428 = vpop.permute.xlu0 %427
        %v430 = vmul.f32 %v423, %v407
        %v431 = vmul.f32 %v428, %v408
        %s432 = scalar_lea.vmem %s1, 48
        %v433 = vld [vmem:[%s432] sm:$0xff]
        %v434 = vld [vmem:[%s432 + $0x8] sm:$0xff]
        %436 = vset.pattern.permute.xlu0 0
        %437 = vperm.xlu0 %436, %v433
        %v438 = vpop.permute.xlu0 %437
        %441 = vset.pattern.permute.xlu0 0
        %442 = vperm.xlu0 %441, %v434
        %v443 = vpop.permute.xlu0 %442
        %v445 = vmul.f32 %v438, %v412
        %v446 = vmul.f32 %v443, %v411
        %v447 = vadd.f32 %v430, %v445
        %v448 = vadd.f32 %v431, %v446
        %s449 = scalar_lea.vmem %s3, 48
        %v450 = vld [vmem:[%s449] sm:$0xff]
        %v451 = vld [vmem:[%s449 + $0x8] sm:$0xff]
        %453 = vset.pattern.permute.xlu0 0
        %454 = vperm.xlu0 %453, %v450
        %v455 = vpop.permute.xlu0 %454
        %458 = vset.pattern.permute.xlu0 0
        %459 = vperm.xlu0 %458, %v451
        %v460 = vpop.permute.xlu0 %459
        %v462 = vmul.f32 %v455, %v415
        %v463 = vmul.f32 %v460, %v416
        %v464 = vadd.f32 %v447, %v462
        %v465 = vadd.f32 %v448, %v463
        %v466 = vrot.slane %v464, 7
        %v467 = vrot.slane %v465, 7
        %v468 = vsel %vm241, %v466, %v467
        %v469 = vsel %vm241, %v467, %v466
        %v470 = vrot.slane %v464, 1
        %v471 = vrot.slane %v465, 1
        %v472 = vsel %vm246, %v470, %v471
        %v473 = vsel %vm246, %v471, %v470
        %s474 = scalar_lea.vmem %s2, 64
        %v475 = vld [vmem:[%s474] sm:$0xff]
        %v476 = vld [vmem:[%s474 + $0x8] sm:$0xff]
        %478 = vset.pattern.permute.xlu0 0
        %479 = vperm.xlu0 %478, %v475
        %v480 = vpop.permute.xlu0 %479
        %483 = vset.pattern.permute.xlu0 0
        %484 = vperm.xlu0 %483, %v476
        %v485 = vpop.permute.xlu0 %484
        %v487 = vmul.f32 %v480, %v464
        %v488 = vmul.f32 %v485, %v465
        %s489 = scalar_lea.vmem %s1, 64
        %v490 = vld [vmem:[%s489] sm:$0xff]
        %v491 = vld [vmem:[%s489 + $0x8] sm:$0xff]
        %493 = vset.pattern.permute.xlu0 0
        %494 = vperm.xlu0 %493, %v490
        %v495 = vpop.permute.xlu0 %494
        %498 = vset.pattern.permute.xlu0 0
        %499 = vperm.xlu0 %498, %v491
        %v500 = vpop.permute.xlu0 %499
        %v502 = vmul.f32 %v495, %v469
        %v503 = vmul.f32 %v500, %v468
        %v504 = vadd.f32 %v487, %v502
        %v505 = vadd.f32 %v488, %v503
        %s506 = scalar_lea.vmem %s3, 64
        %v507 = vld [vmem:[%s506] sm:$0xff]
        %v508 = vld [vmem:[%s506 + $0x8] sm:$0xff]
        %510 = vset.pattern.permute.xlu0 0
        %511 = vperm.xlu0 %510, %v507
        %v512 = vpop.permute.xlu0 %511
        %515 = vset.pattern.permute.xlu0 0
        %516 = vperm.xlu0 %515, %v508
        %v517 = vpop.permute.xlu0 %516
        %v519 = vmul.f32 %v512, %v472
        %v520 = vmul.f32 %v517, %v473
        %v521 = vadd.f32 %v504, %v519
        %v522 = vadd.f32 %v505, %v520
        %v523 = vrot.slane %v521, 7
        %v524 = vrot.slane %v522, 7
        %v525 = vsel %vm241, %v523, %v524
        %v526 = vsel %vm241, %v524, %v523
        %v527 = vrot.slane %v521, 1
        %v528 = vrot.slane %v522, 1
        %v529 = vsel %vm246, %v527, %v528
        %v530 = vsel %vm246, %v528, %v527
        %s531 = scalar_lea.vmem %s2, 80
        %v532 = vld [vmem:[%s531] sm:$0xff]
        %v533 = vld [vmem:[%s531 + $0x8] sm:$0xff]
        %535 = vset.pattern.permute.xlu0 0
        %536 = vperm.xlu0 %535, %v532
        %v537 = vpop.permute.xlu0 %536
        %540 = vset.pattern.permute.xlu0 0
        %541 = vperm.xlu0 %540, %v533
        %v542 = vpop.permute.xlu0 %541
        %v544 = vmul.f32 %v537, %v521
        %v545 = vmul.f32 %v542, %v522
        %s546 = scalar_lea.vmem %s1, 80
        %v547 = vld [vmem:[%s546] sm:$0xff]
        %v548 = vld [vmem:[%s546 + $0x8] sm:$0xff]
        %550 = vset.pattern.permute.xlu0 0
        %551 = vperm.xlu0 %550, %v547
        %v552 = vpop.permute.xlu0 %551
        %555 = vset.pattern.permute.xlu0 0
        %556 = vperm.xlu0 %555, %v548
        %v557 = vpop.permute.xlu0 %556
        %v559 = vmul.f32 %v552, %v526
        %v560 = vmul.f32 %v557, %v525
        %v561 = vadd.f32 %v544, %v559
        %v562 = vadd.f32 %v545, %v560
        %s563 = scalar_lea.vmem %s3, 80
        %v564 = vld [vmem:[%s563] sm:$0xff]
        %v565 = vld [vmem:[%s563 + $0x8] sm:$0xff]
        %567 = vset.pattern.permute.xlu0 0
        %568 = vperm.xlu0 %567, %v564
        %v569 = vpop.permute.xlu0 %568
        %572 = vset.pattern.permute.xlu0 0
        %573 = vperm.xlu0 %572, %v565
        %v574 = vpop.permute.xlu0 %573
        %v576 = vmul.f32 %v569, %v529
        %v577 = vmul.f32 %v574, %v530
        %v578 = vadd.f32 %v561, %v576
        %v579 = vadd.f32 %v562, %v577
        %v580 = vrot.slane %v578, 7
        %v581 = vrot.slane %v579, 7
        %v582 = vsel %vm241, %v580, %v581
        %v583 = vsel %vm241, %v581, %v580
        %v584 = vrot.slane %v578, 1
        %v585 = vrot.slane %v579, 1
        %v586 = vsel %vm246, %v584, %v585
        %v587 = vsel %vm246, %v585, %v584
        %s588 = scalar_lea.vmem %s2, 96
        %v589 = vld [vmem:[%s588] sm:$0xff]
        %v590 = vld [vmem:[%s588 + $0x8] sm:$0xff]
        %592 = vset.pattern.permute.xlu0 0
        %593 = vperm.xlu0 %592, %v589
        %v594 = vpop.permute.xlu0 %593
        %597 = vset.pattern.permute.xlu0 0
        %598 = vperm.xlu0 %597, %v590
        %v599 = vpop.permute.xlu0 %598
        %v601 = vmul.f32 %v594, %v578
        %v602 = vmul.f32 %v599, %v579
        %s603 = scalar_lea.vmem %s1, 96
        %v604 = vld [vmem:[%s603] sm:$0xff]
        %v605 = vld [vmem:[%s603 + $0x8] sm:$0xff]
        %607 = vset.pattern.permute.xlu0 0
        %608 = vperm.xlu0 %607, %v604
        %v609 = vpop.permute.xlu0 %608
        %612 = vset.pattern.permute.xlu0 0
        %613 = vperm.xlu0 %612, %v605
        %v614 = vpop.permute.xlu0 %613
        %v616 = vmul.f32 %v609, %v583
        %v617 = vmul.f32 %v614, %v582
        %v618 = vadd.f32 %v601, %v616
        %v619 = vadd.f32 %v602, %v617
        %s620 = scalar_lea.vmem %s3, 96
        %v621 = vld [vmem:[%s620] sm:$0xff]
        %v622 = vld [vmem:[%s620 + $0x8] sm:$0xff]
        %624 = vset.pattern.permute.xlu0 0
        %625 = vperm.xlu0 %624, %v621
        %v626 = vpop.permute.xlu0 %625
        %629 = vset.pattern.permute.xlu0 0
        %630 = vperm.xlu0 %629, %v622
        %v631 = vpop.permute.xlu0 %630
        %v633 = vmul.f32 %v626, %v586
        %v634 = vmul.f32 %v631, %v587
        %v635 = vadd.f32 %v618, %v633
        %v636 = vadd.f32 %v619, %v634
        %v637 = vrot.slane %v635, 7
        %v638 = vrot.slane %v636, 7
        %v639 = vsel %vm241, %v637, %v638
        %v640 = vsel %vm241, %v638, %v637
        %v641 = vrot.slane %v635, 1
        %v642 = vrot.slane %v636, 1
        %v643 = vsel %vm246, %v641, %v642
        %v644 = vsel %vm246, %v642, %v641
        %s645 = scalar_lea.vmem %s2, 112
        %v646 = vld [vmem:[%s645] sm:$0xff]
        %v647 = vld [vmem:[%s645 + $0x8] sm:$0xff]
        %649 = vset.pattern.permute.xlu0 0
        %650 = vperm.xlu0 %649, %v646
        %v651 = vpop.permute.xlu0 %650
        %654 = vset.pattern.permute.xlu0 0
        %655 = vperm.xlu0 %654, %v647
        %v656 = vpop.permute.xlu0 %655
        %v658 = vmul.f32 %v651, %v635
        %v659 = vmul.f32 %v656, %v636
        %s660 = scalar_lea.vmem %s1, 112
        %v661 = vld [vmem:[%s660] sm:$0xff]
        %v662 = vld [vmem:[%s660 + $0x8] sm:$0xff]
        %664 = vset.pattern.permute.xlu0 0
        %665 = vperm.xlu0 %664, %v661
        %v666 = vpop.permute.xlu0 %665
        %669 = vset.pattern.permute.xlu0 0
        %670 = vperm.xlu0 %669, %v662
        %v671 = vpop.permute.xlu0 %670
        %v673 = vmul.f32 %v666, %v640
        %v674 = vmul.f32 %v671, %v639
        %v675 = vadd.f32 %v658, %v673
        %v676 = vadd.f32 %v659, %v674
        %s677 = scalar_lea.vmem %s3, 112
        %v678 = vld [vmem:[%s677] sm:$0xff]
        %v679 = vld [vmem:[%s677 + $0x8] sm:$0xff]
        %681 = vset.pattern.permute.xlu0 0
        %682 = vperm.xlu0 %681, %v678
        %v683 = vpop.permute.xlu0 %682
        %686 = vset.pattern.permute.xlu0 0
        %687 = vperm.xlu0 %686, %v679
        %v688 = vpop.permute.xlu0 %687
        %v690 = vmul.f32 %v683, %v643
        %v691 = vmul.f32 %v688, %v644
        %v692 = vadd.f32 %v675, %v690
        %v693 = vadd.f32 %v676, %v691
        %694 = vst [vmem:[%s234] sm:$0xff] %v692
        %695 = vst [vmem:[%s234 + $0x8] sm:$0xff] %v693
        %s696 = sand.u32 %s115, 1
        %s697 = scalar_lea.sflag [#allocation4], %s696
        %s698 = sand.u32 %s115, 1
        %s699 = smul.addr %s698, 16
        %s700 = scalar_lea.vmem [#allocation3], %s699
        // Predicated region
        $region75: #{tpu_custom_call.1} parent=69 // pred_check
          %p701 = pneg %p125
        $region76: #{tpu_custom_call.1} parent=69 // pred_check_branch
          %703 = sbr.rel (%p701) target = $region78
        $region77: #{tpu_custom_call.1} parent=69 // pred_region
          %s705 = ssub.s32 256, 256
          %706 = vsyncadd %s697, %s705
          %s707 = smul.addr %s18, 128
          %s708 = scalar_lea.hbm %s4, %s707
          %s709 = sshll.u32 %s700, 4
          %s710 = int_to_ptr.vmem [resolvable:$true] %s709
          %715 = dma.vmem_to_hbm [thread:$0]  %s710, 256, %s708, %s697, 128, 256, 8
        $region78: #{tpu_custom_call.1} parent=69 // pred_fallthru
          _
      $region70: #{tpu_custom_call.1} parent=5 // pred_fallthru
        _
      %p716 = scmp.le.s32.totalorder 2, %s13
      // Predicated region
      $region79: #{tpu_custom_call.1} parent=5 // pred_check
        %p717 = pneg %p716
      $region80: #{tpu_custom_call.1} parent=5 // pred_check_branch
        %719 = sbr.rel (%p717) target = $region82
      $region81: #{tpu_custom_call.1} parent=5 // pred_region
        %s720 = ssub.s32 %s13, 2
        // Predicated region
        $region83: #{tpu_custom_call.1} parent=81 // pred_check
          %p721 = pneg %p131
        $region84: #{tpu_custom_call.1} parent=81 // pred_check_branch
          %723 = sbr.rel (%p721) target = $region86
        $region85: #{tpu_custom_call.1} parent=81 // pred_region
          %s724 = sand.u32 %s116, 1
          %s725 = scalar_lea.sflag [#allocation4], %s724
          %s726 = sand.u32 %s116, 1
          %s727 = smul.addr %s726, 16
          %s728 = scalar_lea.vmem [#allocation3], %s727
          %729 = dma.done %s725, 256
        $region86: #{tpu_custom_call.1} parent=81 // pred_fallthru
          _
      $region82: #{tpu_custom_call.1} parent=5 // pred_fallthru
        _
    $region6: #{tpu_custom_call.1} parent=1 // loop_footer
      %s17 = sadd.s32 1, %s13
    $region7: #{tpu_custom_call.1} parent=1 // loop_footer_branch
      %12 = sbr.rel target = $region3
    $region8: #{tpu_custom_call.1} parent=1 // loop_exit
      _
    %730 = vsyncpa [#allocation4], 1
    %s731 = scalar_lea.sflag [#allocation4], 1
    %732 = vsyncpa %s731, 1

</llo_original>
